<compile_context>
chip_gen: v7x
topology: tpu7x:2x2x1
jax: 0.10.0
libtpu: 0.0.40
codegen_flags: <defaults>
</compile_context>

<pallas_src>
import numpy as np
import jax
import jax.numpy as jnp
from jax.experimental import pallas as pl
from jax.experimental.pallas import tpu as pltpu


def _round_up(n, m):
    return ((n + m - 1) // m) * m


def _orthogonal(key, shape, gain=1.0, dtype=jnp.float32):
    """Orthogonal init following torch.nn.init.orthogonal_'s procedure."""
    rows, cols = shape
    a = jax.random.normal(key, (rows, cols), dtype=jnp.float32)
    if rows < cols:
        a = a.T
    q, r = jnp.linalg.qr(a)
    d = jnp.sign(jnp.diagonal(r))
    q = q * d[None, :]
    if rows < cols:
        q = q.T
    return (gain * q).astype(dtype)


def _linear_kernel(x_ref, w_ref, o_ref):
    # Single MXU matmul on VMEM-resident tiles; f32 accumulation.
    o_ref[...] = jnp.dot(
        x_ref[...], w_ref[...], preferred_element_type=jnp.float32
    ).astype(o_ref.dtype)


_SMALL_BATCH_MAX = 4096             # gridless single-matmul path up to this batch
_TB_MAX = 2048                      # max batch tile for the gridded path
_VMEM_LIMIT = 32 * 1024 * 1024      # explicit scoped-VMEM limit (safe on v5e too)


def _cost(B, S, A):
    # True (unpadded) flops / bytes so XLA's scheduler hint stays honest.
    return pl.CostEstimate(
        flops=2 * B * S * A,
        transcendentals=0,
        bytes_accessed=4 * (B * S + S * A + B * A),
    )


def _forward_small(x, w_t):
    """Gridless path: whole (unpadded) operands resident in VMEM, one matmul."""
    B, S = x.shape
    _, A = w_t.shape
    return pl.pallas_call(
        _linear_kernel,
        out_shape=jax.ShapeDtypeStruct((B, A), x.dtype),
        in_specs=[
            pl.BlockSpec(memory_space=pltpu.MemorySpace.VMEM),
            pl.BlockSpec(memory_space=pltpu.MemorySpace.VMEM),
        ],
        out_specs=pl.BlockSpec(memory_space=pltpu.MemorySpace.VMEM),
        compiler_params=pltpu.CompilerParams(vmem_limit_bytes=_VMEM_LIMIT),
        cost_estimate=_cost(B, S, A),
    )(x, w_t)


def _forward_tiled(x, w_t):
    """Batch-tiled path: grid over batch only, weight resident, parallel axis."""
    B, S = x.shape
    _, A = w_t.shape
    # At least 2 grid steps so the "parallel" axis can shard across both TCs on
    # v7x; on single-TC v5e/v6e the extra step costs ~0.35 us (noise).
    tb = min(_TB_MAX, _round_up(pl.cdiv(B, 2), 8))
    grid = (pl.cdiv(B, tb),)  # boundary block handles ragged batch, no padding
    return pl.pallas_call(
        _linear_kernel,
        out_shape=jax.ShapeDtypeStruct((B, A), x.dtype),
        grid=grid,
        in_specs=[
            # Last dims (S=32, A=8) equal the full array dims -> (8,128) rule waived.
            pl.BlockSpec((tb, S), lambda i: (i, 0)),
            pl.BlockSpec((S, A), lambda i: (0, 0)),   # weight stays resident
        ],
        out_specs=pl.BlockSpec((tb, A), lambda i: (i, 0)),
        compiler_params=pltpu.CompilerParams(
            dimension_semantics=("parallel",),
            vmem_limit_bytes=_VMEM_LIMIT,
        ),
        cost_estimate=_cost(B, S, A),
    )(x, w_t)


def actor_forward(x, w_t):
    """x: (B, state_dim) f32; w_t: (state_dim, action_dim) f32 -> (B, action_dim)."""
    B, S = x.shape
    S_w, _ = w_t.shape
    assert S == S_w
    if B <= _SMALL_BATCH_MAX:
        return _forward_small(x, w_t)
    return _forward_tiled(x, w_t)


class ActorParams:
    """Deterministic parameter construction mirroring Actor.__init__."""

    def __init__(self, state_dim, action_dim, init_std=1.0, key=None):
        key = jax.random.PRNGKey(0) if key is None else key
        self.state_dim = state_dim
        self.action_dim = action_dim
        # PyTorch weight is (action_dim, state_dim); kernel uses the transpose.
        w = _orthogonal(key, (action_dim, state_dim), gain=1.0)
        self.w_t = jnp.transpose(w)  # (state_dim, action_dim)
        # Frozen, unused-in-forward parameter (kept for parity with the module).
        self.log_std = jnp.full((action_dim,), np.log(init_std), dtype=jnp.float32)

    def __call__(self, x):
        return actor_forward(x, self.w_t)


if __name__ == "__main__":
    state_dim = 32
    action_dim = 8

    key = jax.random.PRNGKey(0)
    k_param, k_x_small, k_x_big = jax.random.split(key, 3)

    actor = ActorParams(state_dim, action_dim, init_std=1.0, key=k_param)

    # Small-batch (gridless) path.
    batch = 4
    x = jax.random.normal(k_x_small, (batch, state_dim), dtype=jnp.float32)
    y = jax.block_until_ready(actor(x))
    y_ref = x @ actor.w_t
    np.testing.assert_allclose(np.asarray(y), np.asarray(y_ref), rtol=1e-5, atol=1e-5)
    assert y.shape == (batch, action_dim)

    # Large-batch (batch-tiled, parallel grid) path.
    big_batch = 8192
    xb = jax.random.normal(k_x_big, (big_batch, state_dim), dtype=jnp.float32)
    yb = jax.block_until_ready(actor(xb))
    yb_ref = xb @ actor.w_t
    np.testing.assert_allclose(np.asarray(yb), np.asarray(yb_ref), rtol=1e-5, atol=1e-5)
    assert yb.shape == (big_batch, action_dim)

    print("KERNEL_OK")
</pallas_src>

<mosaic_0001>
module attributes {stable_mosaic.version = 11 : i64} {
  func.func @_linear_kernel(%arg0: memref<4x32xf32, #tpu.memory_space<vmem>>, %arg1: memref<32x8xf32, #tpu.memory_space<vmem>>, %arg2: memref<4x8xf32, #tpu.memory_space<vmem>>) attributes {dimension_semantics = [], scalar_prefetch = 0 : i64, scratch_operands = 0 : i64, tpu.core_type = #tpu.core_type<tc>} {
    %c0 = arith.constant 0 : index
    %c0_0 = arith.constant 0 : index
    %0 = vector.load %arg0[%c0, %c0_0] : memref<4x32xf32, #tpu.memory_space<vmem>>, vector<4x32xf32>
    %c0_1 = arith.constant 0 : index
    %c0_2 = arith.constant 0 : index
    %1 = vector.load %arg1[%c0_1, %c0_2] : memref<32x8xf32, #tpu.memory_space<vmem>>, vector<32x8xf32>
    %cst = arith.constant dense<0.000000e+00> : vector<4x8xf32>
    %2 = tpu.matmul %0, %1, %cst {dimension_numbers = #tpu.dot_dimension_numbers<[1], [0], [0], [1], [0, 0, 1, 1], [], []>} : vector<4x32xf32>, vector<32x8xf32>, vector<4x8xf32> -> vector<4x8xf32>
    %c0_3 = arith.constant 0 : index
    %c0_4 = arith.constant 0 : index
    %3 = vector.load %arg2[%c0_3, %c0_4] : memref<4x8xf32, #tpu.memory_space<vmem>>, vector<4x8xf32>
    tpu.vector_store %arg2[%c0_3, %c0_4], %2 {strides = array<i32>} : memref<4x8xf32, #tpu.memory_space<vmem>>, vector<4x8xf32>,
    return
  }
}

</mosaic_0001>

<llo_original>
// kernel: tpu_custom_call.1
$region0: #{tpu_custom_call.1}
  #allocation0 [shape = 'u32[]', space=smem, size = 0x4, offset = 0x4, fixed_abs, tag = 'smem constant byte address 0x4 - core index']
  #allocation1 [shape = 'u32[144,128]{1,0:T(1,128)}', space=vmem, size = 0x12000, scoped, tag = 'internal scratch']
  %s0 = inlined_call_operand.vmem [shape: f32[4,32], index: 0, kind: input, shape index: {}]
  %s1 = inlined_call_operand.vmem [shape: f32[32,8], index: 1, kind: input, shape index: {}]
  %s2 = inlined_call_operand.hbm [shape: f32[4,8], index: 2, kind: output, shape index: {}]
  %s3 = sld [smem:[#allocation0]]
  $region18: #{tpu_custom_call.1} parent=0
    _
  %s5 = ssub.s32 1, %s3
  %s6 = scalar_select 0, %s5, %s3
  $region1: #{tpu_custom_call.1} parent=0
    #allocation2 [shape = 'u8[2048]{0}', space=vmem, size = 0x800, scoped, tag = 'output window, operand 0, single buffered']
    #allocation3 [shape = 's32[1]{0}', space=sflag, size = 0x4, scoped, tag = 'scoped memory for tpu_custom_call.1']
    %7 = vsyncpa [#allocation3], 0
    // Predicated region
    $region2: #{tpu_custom_call.1} parent=1 // pred_check
      _
    $region3: #{tpu_custom_call.1} parent=1 // pred_check_branch
      %9 = sbr.rel (0) target = $region5
    $region4: #{tpu_custom_call.1} parent=1 // pred_region
      _
    $region5: #{tpu_custom_call.1} parent=1 // pred_fallthru
      _
    // Predicated region
    $region6: #{tpu_custom_call.1} parent=1 // pred_check
      _
    $region7: #{tpu_custom_call.1} parent=1 // pred_check_branch
      %11 = sbr.rel (0) target = $region9
    $region8: #{tpu_custom_call.1} parent=1 // pred_region
      _
    $region9: #{tpu_custom_call.1} parent=1 // pred_fallthru
      _
    %v12 = vld [vmem:[%s0] sm:$0xf]
    %v13 = vld [vmem:[%s1] sm:$0xff]
    %v14 = vld [vmem:[%s1 + $0x8] sm:$0xff]
    %v15 = vld [vmem:[%s1 + $0x10] sm:$0xff]
    %v16 = vld [vmem:[%s1 + $0x18] sm:$0xff]
    %vm17 = vcmask 261120
    %v19 = vsel %vm17, %v12, 0
    %21 = vmatprep.subr.mxu0 0.0
    %22 = vmatpush1.msra.mxu0 %v13
    %23 = vmatprep.subr.mxu0 0.0
    %24 = vmatpush1.msra.mxu0 %v14
    %25 = vmatprep.subr.mxu0 0.0
    %26 = vmatpush1.msra.mxu0 %v15
    %27 = vmatprep.subr.mxu0 0.0
    %28 = vmatpush1.msra.mxu0 %v16
    %29 = vmatprep.subr.mxu0 0.0
    %30 = vmatpush1.msra.mxu0 0.0
    %31 = vmatprep.subr.mxu0 0.0
    %32 = vmatpush1.msra.mxu0 0.0
    %33 = vmatprep.subr.mxu0 0.0
    %34 = vmatpush1.msra.mxu0 0.0
    %35 = vmatprep.subr.mxu0 0.0
    %36 = vmatpush1.msra.mxu0 0.0
    %37 = vmatprep.subr.mxu0 0.0
    %38 = vmatpush1.msra.mxu0 0.0
    %39 = vmatprep.subr.mxu0 0.0
    %40 = vmatpush1.msra.mxu0 0.0
    %41 = vmatprep.subr.mxu0 0.0
    %42 = vmatpush1.msra.mxu0 0.0
    %43 = vmatprep.subr.mxu0 0.0
    %44 = vmatpush1.msra.mxu0 0.0
    %45 = vmatprep.subr.mxu0 0.0
    %46 = vmatpush1.msra.mxu0 0.0
    %47 = vmatprep.subr.mxu0 0.0
    %48 = vmatpush1.msra.mxu0 0.0
    %49 = vmatprep.subr.mxu0 0.0
    %50 = vmatpush1.msra.mxu0 0.0
    %51 = vmatprep.subr.mxu0 0.0
    %52 = vmatpush1.msra.mxu0 0.0
    %53 = vmatprep.subr.mxu0 0.0
    %54 = vmatpush1.msra.mxu0 0.0
    %55 = vmatprep.subr.mxu0 0.0
    %56 = vmatpush1.msra.mxu0 0.0
    %57 = vmatprep.subr.mxu0 0.0
    %58 = vmatpush1.msra.mxu0 0.0
    %59 = vmatprep.subr.mxu0 0.0
    %60 = vmatpush1.msra.mxu0 0.0
    %61 = vmatprep.subr.mxu0 0.0
    %62 = vmatpush1.msra.mxu0 0.0
    %63 = vmatprep.subr.mxu0 0.0
    %64 = vmatpush1.msra.mxu0 0.0
    %65 = vmatprep.subr.mxu0 0.0
    %66 = vmatpush1.msra.mxu0 0.0
    %67 = vmatprep.subr.mxu0 0.0
    %68 = vmatpush1.msra.mxu0 0.0
    %69 = vmatprep.subr.mxu0 0.0
    %70 = vmatpush1.msra.mxu0 0.0
    %71 = vmatprep.subr.mxu0 0.0
    %72 = vmatpush1.msra.mxu0 0.0
    %73 = vmatprep.subr.mxu0 0.0
    %74 = vmatpush1.msra.mxu0 0.0
    %75 = vmatprep.subr.mxu0 0.0
    %76 = vmatpush1.msra.mxu0 0.0
    %77 = vmatprep.subr.mxu0 0.0
    %78 = vmatpush1.msra.mxu0 0.0
    %79 = vmatprep.subr.mxu0 0.0
    %80 = vmatpush1.msra.mxu0 0.0
    %81 = vmatprep.subr.mxu0 0.0
    %82 = vmatpush1.msra.mxu0 0.0
    %83 = vmatprep.subr.mxu0 0.0
    %84 = vmatpush1.msra.mxu0 0.0
    %85 = vmatprep.mubr.f32.mxu0 0.0
    %86 = vmatmul.mubr.f32.gmra.mrb[0].mxu0 %v19
    %v87 = vpop.f32.mrb[0].mxu0
    %v88 = vadd.f32 0.0, %v87
    %v89 = vpop.f32.mrb[0].mxu0
    %90 = vdwg.mxu0
    %vm91 = vcmask 60416
    %92 = vst.msk [vmem:[#allocation2] sm:$0xf] %vm91, %v88
    // Predicated region
    $region10: #{tpu_custom_call.1} parent=1 // pred_check
      _
    $region11: #{tpu_custom_call.1} parent=1 // pred_check_branch
      %94 = sbr.rel (0) target = $region13
    $region12: #{tpu_custom_call.1} parent=1 // pred_region
      %s96 = ssub.s32 64, 64
      %97 = vsyncadd [#allocation3], %s96
      %s99 = sshll.u32 [#allocation2], 4
      %s100 = int_to_ptr.vmem [resolvable:$true] %s99
      %102 = dma.vmem_to_hbm [thread:$0]  %s100, 64, %s2, [#allocation3]
    $region13: #{tpu_custom_call.1} parent=1 // pred_fallthru
      _
    // Predicated region
    $region14: #{tpu_custom_call.1} parent=1 // pred_check
      _
    $region15: #{tpu_custom_call.1} parent=1 // pred_check_branch
      %104 = sbr.rel (0) target = $region17
    $region16: #{tpu_custom_call.1} parent=1 // pred_region
      %105 = dma.done [#allocation3], 64
    $region17: #{tpu_custom_call.1} parent=1 // pred_fallthru
      _
    %106 = vsyncpa [#allocation3], 1

</llo_original>
